<compile_context>
chip_gen: v5e
topology: v5e:2x2
jax: 0.10.0
libtpu: 0.0.40
codegen_flags: <defaults>
</compile_context>

<pallas_src>
import functools
import math

import jax
import jax.numpy as jnp
import numpy as np
from jax.experimental import pallas as pl
from jax.experimental.pallas import tpu as pltpu


# ---------------------------------------------------------------------------
# Activation (torch: ReLU / Sigmoid / ShiftedSoftplus(-5, beta=1, thr=20) / Id)
# ---------------------------------------------------------------------------
def _apply_act(y, act_func):
    if act_func == "relu":
        return jnp.maximum(y, 0.0)
    if act_func == "sigmoid":
        return jax.nn.sigmoid(y)
    if act_func == "ssoftplus":
        z = y - 5.0
        # softplus with threshold=20 (linear passthrough above); log1p for
        # better accuracy at very negative z.
        return jnp.where(z > 20.0, z, jnp.log1p(jnp.exp(jnp.minimum(z, 20.0))))
    return y


def _round_up(v, m):
    return ((v + m - 1) // m) * m


# ---------------------------------------------------------------------------
# Kernel
# ---------------------------------------------------------------------------
def _stacked_fc_kernel(x_ref, idx_ref, w_ref, b_ref, o_ref, *,
                       n, k, out_c, group_layers, lane_pad, act_func):
    # x_ref  : (TB, IN_C)          compute dtype (bf16/f32) row tile
    # idx_ref: (TB, K)             i32  selected layer ids for this tile
    # w_ref  : (IN_C, N*OUT_C)     compute dtype, VMEM-resident
    # b_ref  : (1,    N*OUT_C)     f32,  VMEM-resident
    # o_ref  : (TB, K*OUT_C + pad) f32  lane-dense output tile
    tb = x_ref.shape[0]
    x = x_ref[...]
    idx = idx_ref[...]

    # Hoist the per-slot index broadcast once (K broadcasts total, not K*N).
    sel = [jnp.broadcast_to(idx[:, kk:kk + 1], (tb, out_c)) for kk in range(k)]
    acc = [jnp.zeros((tb, out_c), jnp.float32) for _ in range(k)]

    # Layer-group tiling: caps the live matmul intermediate at
    # (TB, group_layers*OUT_C) instead of (TB, N*OUT_C).
    for g0 in range(0, n, group_layers):
        gs = min(group_layers, n - g0)
        lo, hi = g0 * out_c, (g0 + gs) * out_c
        # One MXU matmul over this group of layers; f32 accumulation.
        yg = jnp.dot(x, w_ref[:, lo:hi],
                     preferred_element_type=jnp.float32) + b_ref[:, lo:hi]
        for j in range(gs):
            nn = g0 + j
            slab = yg[:, j * out_c:(j + 1) * out_c]        # static slice
            for kk in range(k):
                # Masked multiply-accumulate: no serial where-chain; the
                # adds/mults can fill the VALU slots in parallel.
                m = (sel[kk] == nn).astype(jnp.float32)
                acc[kk] = acc[kk] + m * slab

    cols = acc
    if lane_pad:
        cols = cols + [jnp.zeros((tb, lane_pad), jnp.float32)]
    out = jnp.concatenate(cols, axis=-1)   # (TB, W_pad): single unmasked store
    o_ref[...] = _apply_act(out, act_func).astype(o_ref.dtype)


# ---------------------------------------------------------------------------
# Wrapper
# ---------------------------------------------------------------------------
def _vmem_capacity_bytes():
    try:
        return int(pltpu.get_tpu_info().vmem_capacity_bytes)
    except Exception:
        return 64 * 1024 * 1024          # conservative default (v7x per-TC)


def _pick_row_tile(b, min_tb):
    """Largest row tile that still yields >= 4 (else >= 2) grid steps."""
    b_r = max(min_tb, _round_up(b, min_tb))
    candidates = [t for t in (512, 256, 128, 64, 32, 16, 8)
                  if min_tb <= t <= b_r]
    if not candidates:
        return min_tb
    for min_steps in (4, 2):
        for t in candidates:
            if pl.cdiv(b, t) >= min_steps:
                return t
    return candidates[-1]                 # tiny batches: single step


def _vmem_bytes_estimate(tb, gs, in_c, n, k, out_c, out_w_pad, cdt_bytes):
    # Resident tables counted at 2x: the BlockSpec pipeline double-buffers
    # every input even with a constant index_map (pl.Buffered(1) would halve
    # this; we keep the conservative accounting so either way fits).
    resident = 2 * (in_c * n * out_c * cdt_bytes + n * out_c * 4)
    # Double-buffered streamed tiles (x, idx, out).
    streamed = 2 * tb * (in_c * cdt_bytes + k * 4 + out_w_pad * 4)
    # Live in-kernel temporaries: one layer-group matmul intermediate (x2 for
    # the mask/product temps) + K accumulators + K hoisted index broadcasts.
    temps = 2 * tb * gs * out_c * 4 + 2 * tb * k * out_c * 4
    return resident + streamed + temps


def stacked_fc_fast(x, idx, w, bias, act_func="relu",
                    compute_dtype=jnp.bfloat16):
    """x: (B, IN_C), idx: (B, K) int, w: (N, IN_C, OUT_C), bias: (N, 1, OUT_C).
    Returns (B, K, OUT_C) float32 = act(x @ w[idx] + bias[idx])."""
    assert act_func in ("relu", "sigmoid", "ssoftplus", "none")
    b, in_c = x.shape
    _, k = idx.shape
    n, _, out_c = w.shape
    cdt = jnp.dtype(compute_dtype)

    # Flatten the weight table once: w_flat[i, nn*OUT_C + o] = w[nn, i, o].
    # Weights and x in the compute dtype; bias kept f32 (tiny) so the
    # select/activation path stays in full f32 on every TPU generation.
    w_flat = jnp.transpose(w, (1, 0, 2)).reshape(in_c, n * out_c).astype(cdt)
    b_flat = bias.reshape(1, n * out_c).astype(jnp.float32)
    x_c = x.astype(cdt)
    idx_i = idx.astype(jnp.int32)

    out_w = k * out_c
    out_w_pad = _round_up(max(out_w, 128), 128)    # lane-dense output store
    lane_pad = out_w_pad - out_w

    # ---- VMEM-aware tiling (generation-aware capacity) -------------------
    cap = _vmem_capacity_bytes()
    budget = int(0.80 * cap)
    min_tb = 16 if cdt.itemsize < 4 else 8         # bf16-safe sublane tiles
    tb = _pick_row_tile(b, min_tb)
    gs = min(n, max(1, 2048 // max(out_c, 1)))     # layer-group lane budget
    while True:
        est = _vmem_bytes_estimate(tb, gs, in_c, n, k, out_c, out_w_pad,
                                   cdt.itemsize)
        if est <= budget:
            break
        if gs > 1:                                  # shrink intermediate first
            gs = max(1, gs // 2)
        elif tb > min_tb:                           # then the row tile
            tb = max(min_tb, tb // 2)
        else:
            # TODO(synk): grouped-matmul path (sort (b, k) pairs by idx and
            # scalar-prefetch group offsets) for weight tables that do not
            # fit the resident-VMEM budget.
            raise NotImplementedError(
                "stacked_fc_fast: weight table too large for resident-VMEM path")
    vmem_limit = int(min(cap, max(32 * 1024 * 1024, int(1.3 * est) + (2 << 20))))

    # Pad the batch so the grid tiles it exactly (tail rows sliced off below).
    num_tiles = pl.cdiv(b, tb)
    b_pad = num_tiles * tb
    if b_pad != b:
        x_c = jnp.pad(x_c, ((0, b_pad - b), (0, 0)))
        idx_i = jnp.pad(idx_i, ((0, b_pad - b), (0, 0)))

    kernel = functools.partial(
        _stacked_fc_kernel, n=n, k=k, out_c=out_c, group_layers=gs,
        lane_pad=lane_pad, act_func=act_func)

    out = pl.pallas_call(
        kernel,
        out_shape=jax.ShapeDtypeStruct((b_pad, out_w_pad), jnp.float32),
        grid_spec=pltpu.PrefetchScalarGridSpec(
            num_scalar_prefetch=0,
            grid=(num_tiles,),
            in_specs=[
                pl.BlockSpec((tb, in_c), lambda i: (i, 0)),
                pl.BlockSpec((tb, k), lambda i: (i, 0)),
                # VMEM-resident tables (constant index_map).
                pl.BlockSpec((in_c, n * out_c), lambda i: (0, 0)),
                pl.BlockSpec((1, n * out_c), lambda i: (0, 0)),
            ],
            out_specs=pl.BlockSpec((tb, out_w_pad), lambda i: (i, 0)),
        ),
        compiler_params=pltpu.CompilerParams(
            dimension_semantics=("parallel",),
            vmem_limit_bytes=vmem_limit,
        ),
    )(x_c, idx_i, w_flat, b_flat)
    return out[:b, :out_w].reshape(b, k, out_c)


# ---------------------------------------------------------------------------
# Pure-JAX reference and param init (for the self-test)
# ---------------------------------------------------------------------------
def stacked_fc_reference(x, idx, w, bias, act_func="relu"):
    wg = w[idx]                 # (B, K, IN_C, OUT_C)
    bg = bias[idx][:, :, 0, :]  # (B, K, OUT_C)
    y = jnp.einsum("bi,bkio->bko", x, wg,
                   precision=jax.lax.Precision.HIGHEST) + bg
    return _apply_act(y, act_func)


def init_params(key, n, in_c, out_c, act_func="relu"):
    # xavier_uniform_ with gain (PyTorch fan convention for 3-D tensors).
    gain = math.sqrt(2.0) if act_func in ("relu", "ssoftplus") else 1.0
    fan_in = in_c * out_c
    fan_out = n * out_c
    bound = gain * math.sqrt(6.0 / (fan_in + fan_out))
    w = jax.random.uniform(key, (n, in_c, out_c), jnp.float32, -bound, bound)
    b = jnp.zeros((n, 1, out_c), jnp.float32)
    return w, b


if __name__ == "__main__":
    # Small shapes: N total layers, K selected per sample.  B=64 so the grid
    # has several row-tile steps (pipelining / core sharding exercised).
    N, K, IN_C, OUT_C, B = 8, 4, 32, 32, 64

    key = jax.random.PRNGKey(0)
    k_w, k_x, k_idx = jax.random.split(key, 3)

    w, bias = init_params(k_w, N, IN_C, OUT_C, "relu")
    x = jax.random.normal(k_x, (B, IN_C), jnp.float32)
    idx = jax.random.randint(k_idx, (B, K), 0, N, jnp.int32)

    # Default fast path (bf16 operands, f32 accumulation): compare against a
    # reference that uses the same bf16-cast operands, so the only delta is
    # f32 accumulation order on the MXU.
    x16 = x.astype(jnp.bfloat16).astype(jnp.float32)
    w16 = w.astype(jnp.bfloat16).astype(jnp.float32)
    for act in ("relu", "sigmoid", "ssoftplus", "none"):
        out = jax.block_until_ready(stacked_fc_fast(x, idx, w, bias, act_func=act))
        ref = stacked_fc_reference(x16, idx, w16, bias, act_func=act)
        assert out.shape == (B, K, OUT_C)
        np.testing.assert_allclose(np.asarray(out), np.asarray(ref),
                                   rtol=2e-5, atol=2e-5)

    # Full-f32 path (exact semantics of the original module's parameters).
    for act in ("relu", "ssoftplus"):
        out = jax.block_until_ready(
            stacked_fc_fast(x, idx, w, bias, act_func=act,
                            compute_dtype=jnp.float32))
        ref = stacked_fc_reference(x, idx, w, bias, act_func=act)
        np.testing.assert_allclose(np.asarray(out), np.asarray(ref),
                                   rtol=1e-5, atol=1e-5)

    print("KERNEL_OK")
</pallas_src>

<mosaic_0001>
module attributes {stable_mosaic.version = 11 : i64} {
  func.func @_stacked_fc_kernel(%arg0: i32, %arg1: memref<16x32xbf16, #tpu.memory_space<vmem>>, %arg2: memref<16x4xi32, #tpu.memory_space<vmem>>, %arg3: memref<32x256xbf16, #tpu.memory_space<vmem>>, %arg4: memref<1x256xf32, #tpu.memory_space<vmem>>, %arg5: memref<16x128xf32, #tpu.memory_space<vmem>>) attributes {dimension_semantics = [#tpu.dimension_semantics<parallel>], iteration_bounds = array<i64: 4>, scalar_prefetch = 0 : i64, scratch_operands = 0 : i64, tpu.core_type = #tpu.core_type<tc>, window_params = [{transform_indices = @transform_0, window_bounds = array<i64: 16, 32>}, {transform_indices = @transform_1, window_bounds = array<i64: 16, 4>}, {pipeline_mode = #tpu.pipeline_mode<synchronous>, transform_indices = @transform_2, window_bounds = array<i64: 32, 256>}, {pipeline_mode = #tpu.pipeline_mode<synchronous>, transform_indices = @transform_3, window_bounds = array<i64: 1, 256>}, {transform_indices = @transform_4, window_bounds = array<i64: 16, 128>}]} {
    %c0 = arith.constant 0 : index
    %c0_0 = arith.constant 0 : index
    %0 = vector.load %arg1[%c0, %c0_0] : memref<16x32xbf16, #tpu.memory_space<vmem>>, vector<16x32xbf16>
    %c0_1 = arith.constant 0 : index
    %c0_2 = arith.constant 0 : index
    %1 = vector.load %arg2[%c0_1, %c0_2] : memref<16x4xi32, #tpu.memory_space<vmem>>, vector<16x4xi32>
    %2 = vector.extract_strided_slice %1 {offsets = [0, 0], sizes = [16, 1], strides = [1, 1]} : vector<16x4xi32> to vector<16x1xi32>
    %3 = vector.shape_cast %2 : vector<16x1xi32> to vector<16x1xi32>
    %4 = vector.broadcast %3 : vector<16x1xi32> to vector<16x32xi32>
    %5 = vector.extract_strided_slice %1 {offsets = [0, 1], sizes = [16, 1], strides = [1, 1]} : vector<16x4xi32> to vector<16x1xi32>
    %6 = vector.shape_cast %5 : vector<16x1xi32> to vector<16x1xi32>
    %7 = vector.broadcast %6 : vector<16x1xi32> to vector<16x32xi32>
    %8 = vector.extract_strided_slice %1 {offsets = [0, 2], sizes = [16, 1], strides = [1, 1]} : vector<16x4xi32> to vector<16x1xi32>
    %9 = vector.shape_cast %8 : vector<16x1xi32> to vector<16x1xi32>
    %10 = vector.broadcast %9 : vector<16x1xi32> to vector<16x32xi32>
    %11 = vector.extract_strided_slice %1 {offsets = [0, 3], sizes = [16, 1], strides = [1, 1]} : vector<16x4xi32> to vector<16x1xi32>
    %12 = vector.shape_cast %11 : vector<16x1xi32> to vector<16x1xi32>
    %13 = vector.broadcast %12 : vector<16x1xi32> to vector<16x32xi32>
    %cst = arith.constant 0.000000e+00 : f32
    %14 = vector.broadcast %cst : f32 to vector<16x32xf32>
    %cst_3 = arith.constant 0.000000e+00 : f32
    %15 = vector.broadcast %cst_3 : f32 to vector<16x32xf32>
    %cst_4 = arith.constant 0.000000e+00 : f32
    %16 = vector.broadcast %cst_4 : f32 to vector<16x32xf32>
    %cst_5 = arith.constant 0.000000e+00 : f32
    %17 = vector.broadcast %cst_5 : f32 to vector<16x32xf32>
    %c0_6 = arith.constant 0 : index
    %c0_7 = arith.constant 0 : index
    %18 = vector.load %arg3[%c0_6, %c0_7] : memref<32x256xbf16, #tpu.memory_space<vmem>>, vector<32x256xbf16>
    %cst_8 = arith.constant dense<0.000000e+00> : vector<16x256xf32>
    %19 = tpu.matmul %0, %18, %cst_8 {dimension_numbers = #tpu.dot_dimension_numbers<[1], [0], [0], [1], [0, 0, 1, 1], [], []>} : vector<16x32xbf16>, vector<32x256xbf16>, vector<16x256xf32> -> vector<16x256xf32>
    %c0_9 = arith.constant 0 : index
    %c0_10 = arith.constant 0 : index
    %20 = vector.load %arg4[%c0_9, %c0_10] : memref<1x256xf32, #tpu.memory_space<vmem>>, vector<1x256xf32>
    %21 = vector.broadcast %20 : vector<1x256xf32> to vector<16x256xf32>
    %22 = arith.addf %19, %21 : vector<16x256xf32>
    %23 = vector.extract_strided_slice %22 {offsets = [0, 0], sizes = [16, 32], strides = [1, 1]} : vector<16x256xf32> to vector<16x32xf32>
    %c0_i32 = arith.constant 0 : i32
    %24 = vector.broadcast %c0_i32 : i32 to vector<16x32xi32>
    %25 = arith.cmpi eq, %4, %24 : vector<16x32xi32>
    %26 = arith.extui %25 : vector<16x32xi1> to vector<16x32xi32>
    %27 = arith.sitofp %26 : vector<16x32xi32> to vector<16x32xf32>
    %28 = arith.mulf %27, %23 : vector<16x32xf32>
    %29 = arith.addf %14, %28 : vector<16x32xf32>
    %c0_i32_11 = arith.constant 0 : i32
    %30 = vector.broadcast %c0_i32_11 : i32 to vector<16x32xi32>
    %31 = arith.cmpi eq, %7, %30 : vector<16x32xi32>
    %32 = arith.extui %31 : vector<16x32xi1> to vector<16x32xi32>
    %33 = arith.sitofp %32 : vector<16x32xi32> to vector<16x32xf32>
    %34 = arith.mulf %33, %23 : vector<16x32xf32>
    %35 = arith.addf %15, %34 : vector<16x32xf32>
    %c0_i32_12 = arith.constant 0 : i32
    %36 = vector.broadcast %c0_i32_12 : i32 to vector<16x32xi32>
    %37 = arith.cmpi eq, %10, %36 : vector<16x32xi32>
    %38 = arith.extui %37 : vector<16x32xi1> to vector<16x32xi32>
    %39 = arith.sitofp %38 : vector<16x32xi32> to vector<16x32xf32>
    %40 = arith.mulf %39, %23 : vector<16x32xf32>
    %41 = arith.addf %16, %40 : vector<16x32xf32>
    %c0_i32_13 = arith.constant 0 : i32
    %42 = vector.broadcast %c0_i32_13 : i32 to vector<16x32xi32>
    %43 = arith.cmpi eq, %13, %42 : vector<16x32xi32>
    %44 = arith.extui %43 : vector<16x32xi1> to vector<16x32xi32>
    %45 = arith.sitofp %44 : vector<16x32xi32> to vector<16x32xf32>
    %46 = arith.mulf %45, %23 : vector<16x32xf32>
    %47 = arith.addf %17, %46 : vector<16x32xf32>
    %48 = vector.extract_strided_slice %22 {offsets = [0, 32], sizes = [16, 32], strides = [1, 1]} : vector<16x256xf32> to vector<16x32xf32>
    %c1_i32 = arith.constant 1 : i32
    %49 = vector.broadcast %c1_i32 : i32 to vector<16x32xi32>
    %50 = arith.cmpi eq, %4, %49 : vector<16x32xi32>
    %51 = arith.extui %50 : vector<16x32xi1> to vector<16x32xi32>
    %52 = arith.sitofp %51 : vector<16x32xi32> to vector<16x32xf32>
    %53 = arith.mulf %52, %48 : vector<16x32xf32>
    %54 = arith.addf %29, %53 : vector<16x32xf32>
    %c1_i32_14 = arith.constant 1 : i32
    %55 = vector.broadcast %c1_i32_14 : i32 to vector<16x32xi32>
    %56 = arith.cmpi eq, %7, %55 : vector<16x32xi32>
    %57 = arith.extui %56 : vector<16x32xi1> to vector<16x32xi32>
    %58 = arith.sitofp %57 : vector<16x32xi32> to vector<16x32xf32>
    %59 = arith.mulf %58, %48 : vector<16x32xf32>
    %60 = arith.addf %35, %59 : vector<16x32xf32>
    %c1_i32_15 = arith.constant 1 : i32
    %61 = vector.broadcast %c1_i32_15 : i32 to vector<16x32xi32>
    %62 = arith.cmpi eq, %10, %61 : vector<16x32xi32>
    %63 = arith.extui %62 : vector<16x32xi1> to vector<16x32xi32>
    %64 = arith.sitofp %63 : vector<16x32xi32> to vector<16x32xf32>
    %65 = arith.mulf %64, %48 : vector<16x32xf32>
    %66 = arith.addf %41, %65 : vector<16x32xf32>
    %c1_i32_16 = arith.constant 1 : i32
    %67 = vector.broadcast %c1_i32_16 : i32 to vector<16x32xi32>
    %68 = arith.cmpi eq, %13, %67 : vector<16x32xi32>
    %69 = arith.extui %68 : vector<16x32xi1> to vector<16x32xi32>
    %70 = arith.sitofp %69 : vector<16x32xi32> to vector<16x32xf32>
    %71 = arith.mulf %70, %48 : vector<16x32xf32>
    %72 = arith.addf %47, %71 : vector<16x32xf32>
    %73 = vector.extract_strided_slice %22 {offsets = [0, 64], sizes = [16, 32], strides = [1, 1]} : vector<16x256xf32> to vector<16x32xf32>
    %c2_i32 = arith.constant 2 : i32
    %74 = vector.broadcast %c2_i32 : i32 to vector<16x32xi32>
    %75 = arith.cmpi eq, %4, %74 : vector<16x32xi32>
    %76 = arith.extui %75 : vector<16x32xi1> to vector<16x32xi32>
    %77 = arith.sitofp %76 : vector<16x32xi32> to vector<16x32xf32>
    %78 = arith.mulf %77, %73 : vector<16x32xf32>
    %79 = arith.addf %54, %78 : vector<16x32xf32>
    %c2_i32_17 = arith.constant 2 : i32
    %80 = vector.broadcast %c2_i32_17 : i32 to vector<16x32xi32>
    %81 = arith.cmpi eq, %7, %80 : vector<16x32xi32>
    %82 = arith.extui %81 : vector<16x32xi1> to vector<16x32xi32>
    %83 = arith.sitofp %82 : vector<16x32xi32> to vector<16x32xf32>
    %84 = arith.mulf %83, %73 : vector<16x32xf32>
    %85 = arith.addf %60, %84 : vector<16x32xf32>
    %c2_i32_18 = arith.constant 2 : i32
    %86 = vector.broadcast %c2_i32_18 : i32 to vector<16x32xi32>
    %87 = arith.cmpi eq, %10, %86 : vector<16x32xi32>
    %88 = arith.extui %87 : vector<16x32xi1> to vector<16x32xi32>
    %89 = arith.sitofp %88 : vector<16x32xi32> to vector<16x32xf32>
    %90 = arith.mulf %89, %73 : vector<16x32xf32>
    %91 = arith.addf %66, %90 : vector<16x32xf32>
    %c2_i32_19 = arith.constant 2 : i32
    %92 = vector.broadcast %c2_i32_19 : i32 to vector<16x32xi32>
    %93 = arith.cmpi eq, %13, %92 : vector<16x32xi32>
    %94 = arith.extui %93 : vector<16x32xi1> to vector<16x32xi32>
    %95 = arith.sitofp %94 : vector<16x32xi32> to vector<16x32xf32>
    %96 = arith.mulf %95, %73 : vector<16x32xf32>
    %97 = arith.addf %72, %96 : vector<16x32xf32>
    %98 = vector.extract_strided_slice %22 {offsets = [0, 96], sizes = [16, 32], strides = [1, 1]} : vector<16x256xf32> to vector<16x32xf32>
    %c3_i32 = arith.constant 3 : i32
    %99 = vector.broadcast %c3_i32 : i32 to vector<16x32xi32>
    %100 = arith.cmpi eq, %4, %99 : vector<16x32xi32>
    %101 = arith.extui %100 : vector<16x32xi1> to vector<16x32xi32>
    %102 = arith.sitofp %101 : vector<16x32xi32> to vector<16x32xf32>
    %103 = arith.mulf %102, %98 : vector<16x32xf32>
    %104 = arith.addf %79, %103 : vector<16x32xf32>
    %c3_i32_20 = arith.constant 3 : i32
    %105 = vector.broadcast %c3_i32_20 : i32 to vector<16x32xi32>
    %106 = arith.cmpi eq, %7, %105 : vector<16x32xi32>
    %107 = arith.extui %106 : vector<16x32xi1> to vector<16x32xi32>
    %108 = arith.sitofp %107 : vector<16x32xi32> to vector<16x32xf32>
    %109 = arith.mulf %108, %98 : vector<16x32xf32>
    %110 = arith.addf %85, %109 : vector<16x32xf32>
    %c3_i32_21 = arith.constant 3 : i32
    %111 = vector.broadcast %c3_i32_21 : i32 to vector<16x32xi32>
    %112 = arith.cmpi eq, %10, %111 : vector<16x32xi32>
    %113 = arith.extui %112 : vector<16x32xi1> to vector<16x32xi32>
    %114 = arith.sitofp %113 : vector<16x32xi32> to vector<16x32xf32>
    %115 = arith.mulf %114, %98 : vector<16x32xf32>
    %116 = arith.addf %91, %115 : vector<16x32xf32>
    %c3_i32_22 = arith.constant 3 : i32
    %117 = vector.broadcast %c3_i32_22 : i32 to vector<16x32xi32>
    %118 = arith.cmpi eq, %13, %117 : vector<16x32xi32>
    %119 = arith.extui %118 : vector<16x32xi1> to vector<16x32xi32>
    %120 = arith.sitofp %119 : vector<16x32xi32> to vector<16x32xf32>
    %121 = arith.mulf %120, %98 : vector<16x32xf32>
    %122 = arith.addf %97, %121 : vector<16x32xf32>
    %123 = vector.extract_strided_slice %22 {offsets = [0, 128], sizes = [16, 32], strides = [1, 1]} : vector<16x256xf32> to vector<16x32xf32>
    %c4_i32 = arith.constant 4 : i32
    %124 = vector.broadcast %c4_i32 : i32 to vector<16x32xi32>
    %125 = arith.cmpi eq, %4, %124 : vector<16x32xi32>
    %126 = arith.extui %125 : vector<16x32xi1> to vector<16x32xi32>
    %127 = arith.sitofp %126 : vector<16x32xi32> to vector<16x32xf32>
    %128 = arith.mulf %127, %123 : vector<16x32xf32>
    %129 = arith.addf %104, %128 : vector<16x32xf32>
    %c4_i32_23 = arith.constant 4 : i32
    %130 = vector.broadcast %c4_i32_23 : i32 to vector<16x32xi32>
    %131 = arith.cmpi eq, %7, %130 : vector<16x32xi32>
    %132 = arith.extui %131 : vector<16x32xi1> to vector<16x32xi32>
    %133 = arith.sitofp %132 : vector<16x32xi32> to vector<16x32xf32>
    %134 = arith.mulf %133, %123 : vector<16x32xf32>
    %135 = arith.addf %110, %134 : vector<16x32xf32>
    %c4_i32_24 = arith.constant 4 : i32
    %136 = vector.broadcast %c4_i32_24 : i32 to vector<16x32xi32>
    %137 = arith.cmpi eq, %10, %136 : vector<16x32xi32>
    %138 = arith.extui %137 : vector<16x32xi1> to vector<16x32xi32>
    %139 = arith.sitofp %138 : vector<16x32xi32> to vector<16x32xf32>
    %140 = arith.mulf %139, %123 : vector<16x32xf32>
    %141 = arith.addf %116, %140 : vector<16x32xf32>
    %c4_i32_25 = arith.constant 4 : i32
    %142 = vector.broadcast %c4_i32_25 : i32 to vector<16x32xi32>
    %143 = arith.cmpi eq, %13, %142 : vector<16x32xi32>
    %144 = arith.extui %143 : vector<16x32xi1> to vector<16x32xi32>
    %145 = arith.sitofp %144 : vector<16x32xi32> to vector<16x32xf32>
    %146 = arith.mulf %145, %123 : vector<16x32xf32>
    %147 = arith.addf %122, %146 : vector<16x32xf32>
    %148 = vector.extract_strided_slice %22 {offsets = [0, 160], sizes = [16, 32], strides = [1, 1]} : vector<16x256xf32> to vector<16x32xf32>
    %c5_i32 = arith.constant 5 : i32
    %149 = vector.broadcast %c5_i32 : i32 to vector<16x32xi32>
    %150 = arith.cmpi eq, %4, %149 : vector<16x32xi32>
    %151 = arith.extui %150 : vector<16x32xi1> to vector<16x32xi32>
    %152 = arith.sitofp %151 : vector<16x32xi32> to vector<16x32xf32>
    %153 = arith.mulf %152, %148 : vector<16x32xf32>
    %154 = arith.addf %129, %153 : vector<16x32xf32>
    %c5_i32_26 = arith.constant 5 : i32
    %155 = vector.broadcast %c5_i32_26 : i32 to vector<16x32xi32>
    %156 = arith.cmpi eq, %7, %155 : vector<16x32xi32>
    %157 = arith.extui %156 : vector<16x32xi1> to vector<16x32xi32>
    %158 = arith.sitofp %157 : vector<16x32xi32> to vector<16x32xf32>
    %159 = arith.mulf %158, %148 : vector<16x32xf32>
    %160 = arith.addf %135, %159 : vector<16x32xf32>
    %c5_i32_27 = arith.constant 5 : i32
    %161 = vector.broadcast %c5_i32_27 : i32 to vector<16x32xi32>
    %162 = arith.cmpi eq, %10, %161 : vector<16x32xi32>
    %163 = arith.extui %162 : vector<16x32xi1> to vector<16x32xi32>
    %164 = arith.sitofp %163 : vector<16x32xi32> to vector<16x32xf32>
    %165 = arith.mulf %164, %148 : vector<16x32xf32>
    %166 = arith.addf %141, %165 : vector<16x32xf32>
    %c5_i32_28 = arith.constant 5 : i32
    %167 = vector.broadcast %c5_i32_28 : i32 to vector<16x32xi32>
    %168 = arith.cmpi eq, %13, %167 : vector<16x32xi32>
    %169 = arith.extui %168 : vector<16x32xi1> to vector<16x32xi32>
    %170 = arith.sitofp %169 : vector<16x32xi32> to vector<16x32xf32>
    %171 = arith.mulf %170, %148 : vector<16x32xf32>
    %172 = arith.addf %147, %171 : vector<16x32xf32>
    %173 = vector.extract_strided_slice %22 {offsets = [0, 192], sizes = [16, 32], strides = [1, 1]} : vector<16x256xf32> to vector<16x32xf32>
    %c6_i32 = arith.constant 6 : i32
    %174 = vector.broadcast %c6_i32 : i32 to vector<16x32xi32>
    %175 = arith.cmpi eq, %4, %174 : vector<16x32xi32>
    %176 = arith.extui %175 : vector<16x32xi1> to vector<16x32xi32>
    %177 = arith.sitofp %176 : vector<16x32xi32> to vector<16x32xf32>
    %178 = arith.mulf %177, %173 : vector<16x32xf32>
    %179 = arith.addf %154, %178 : vector<16x32xf32>
    %c6_i32_29 = arith.constant 6 : i32
    %180 = vector.broadcast %c6_i32_29 : i32 to vector<16x32xi32>
    %181 = arith.cmpi eq, %7, %180 : vector<16x32xi32>
    %182 = arith.extui %181 : vector<16x32xi1> to vector<16x32xi32>
    %183 = arith.sitofp %182 : vector<16x32xi32> to vector<16x32xf32>
    %184 = arith.mulf %183, %173 : vector<16x32xf32>
    %185 = arith.addf %160, %184 : vector<16x32xf32>
    %c6_i32_30 = arith.constant 6 : i32
    %186 = vector.broadcast %c6_i32_30 : i32 to vector<16x32xi32>
    %187 = arith.cmpi eq, %10, %186 : vector<16x32xi32>
    %188 = arith.extui %187 : vector<16x32xi1> to vector<16x32xi32>
    %189 = arith.sitofp %188 : vector<16x32xi32> to vector<16x32xf32>
    %190 = arith.mulf %189, %173 : vector<16x32xf32>
    %191 = arith.addf %166, %190 : vector<16x32xf32>
    %c6_i32_31 = arith.constant 6 : i32
    %192 = vector.broadcast %c6_i32_31 : i32 to vector<16x32xi32>
    %193 = arith.cmpi eq, %13, %192 : vector<16x32xi32>
    %194 = arith.extui %193 : vector<16x32xi1> to vector<16x32xi32>
    %195 = arith.sitofp %194 : vector<16x32xi32> to vector<16x32xf32>
    %196 = arith.mulf %195, %173 : vector<16x32xf32>
    %197 = arith.addf %172, %196 : vector<16x32xf32>
    %198 = vector.extract_strided_slice %22 {offsets = [0, 224], sizes = [16, 32], strides = [1, 1]} : vector<16x256xf32> to vector<16x32xf32>
    %c7_i32 = arith.constant 7 : i32
    %199 = vector.broadcast %c7_i32 : i32 to vector<16x32xi32>
    %200 = arith.cmpi eq, %4, %199 : vector<16x32xi32>
    %201 = arith.extui %200 : vector<16x32xi1> to vector<16x32xi32>
    %202 = arith.sitofp %201 : vector<16x32xi32> to vector<16x32xf32>
    %203 = arith.mulf %202, %198 : vector<16x32xf32>
    %204 = arith.addf %179, %203 : vector<16x32xf32>
    %c7_i32_32 = arith.constant 7 : i32
    %205 = vector.broadcast %c7_i32_32 : i32 to vector<16x32xi32>
    %206 = arith.cmpi eq, %7, %205 : vector<16x32xi32>
    %207 = arith.extui %206 : vector<16x32xi1> to vector<16x32xi32>
    %208 = arith.sitofp %207 : vector<16x32xi32> to vector<16x32xf32>
    %209 = arith.mulf %208, %198 : vector<16x32xf32>
    %210 = arith.addf %185, %209 : vector<16x32xf32>
    %c7_i32_33 = arith.constant 7 : i32
    %211 = vector.broadcast %c7_i32_33 : i32 to vector<16x32xi32>
    %212 = arith.cmpi eq, %10, %211 : vector<16x32xi32>
    %213 = arith.extui %212 : vector<16x32xi1> to vector<16x32xi32>
    %214 = arith.sitofp %213 : vector<16x32xi32> to vector<16x32xf32>
    %215 = arith.mulf %214, %198 : vector<16x32xf32>
    %216 = arith.addf %191, %215 : vector<16x32xf32>
    %c7_i32_34 = arith.constant 7 : i32
    %217 = vector.broadcast %c7_i32_34 : i32 to vector<16x32xi32>
    %218 = arith.cmpi eq, %13, %217 : vector<16x32xi32>
    %219 = arith.extui %218 : vector<16x32xi1> to vector<16x32xi32>
    %220 = arith.sitofp %219 : vector<16x32xi32> to vector<16x32xf32>
    %221 = arith.mulf %220, %198 : vector<16x32xf32>
    %222 = arith.addf %197, %221 : vector<16x32xf32>
    %223 = tpu.concatenate %204, %210, %216, %222 in 1 : vector<16x32xf32>, vector<16x32xf32>, vector<16x32xf32>, vector<16x32xf32> -> vector<16x128xf32>
    %cst_35 = arith.constant 0.000000e+00 : f32
    %224 = vector.broadcast %cst_35 : f32 to vector<16x128xf32>
    %225 = arith.maximumf %223, %224 : vector<16x128xf32>
    %c0_36 = arith.constant 0 : index
    %c0_37 = arith.constant 0 : index
    %226 = vector.load %arg5[%c0_36, %c0_37] : memref<16x128xf32, #tpu.memory_space<vmem>>, vector<16x128xf32>
    tpu.vector_store %arg5[%c0_36, %c0_37], %225 {strides = array<i32>} : memref<16x128xf32, #tpu.memory_space<vmem>>, vector<16x128xf32>,
    return
  }
  func.func @transform_0(%arg0: i32) -> (i32, i32) {
    %c0_i32 = arith.constant 0 : i32
    %c0_i32_0 = arith.constant 0 : i32
    return %arg0, %c0_i32 : i32, i32
  }
  func.func @transform_1(%arg0: i32) -> (i32, i32) {
    %c0_i32 = arith.constant 0 : i32
    %c0_i32_0 = arith.constant 0 : i32
    return %arg0, %c0_i32 : i32, i32
  }
  func.func @transform_2(%arg0: i32) -> (i32, i32) {
    %c0_i32 = arith.constant 0 : i32
    %c0_i32_0 = arith.constant 0 : i32
    %c0_i32_1 = arith.constant 0 : i32
    return %c0_i32, %c0_i32_0 : i32, i32
  }
  func.func @transform_3(%arg0: i32) -> (i32, i32) {
    %c0_i32 = arith.constant 0 : i32
    %c0_i32_0 = arith.constant 0 : i32
    %c0_i32_1 = arith.constant 0 : i32
    return %c0_i32, %c0_i32_0 : i32, i32
  }
  func.func @transform_4(%arg0: i32) -> (i32, i32) {
    %c0_i32 = arith.constant 0 : i32
    %c0_i32_0 = arith.constant 0 : i32
    return %arg0, %c0_i32 : i32, i32
  }
}

</mosaic_0001>

<llo_original>
// kernel: tpu_custom_call.1
$region0: #{tpu_custom_call.1}
  #allocation0 [shape = 'u32[]', space=smem, size = 0x4, offset = 0x4, fixed_abs, tag = 'smem constant byte address 0x4 - core index']
  #allocation1 [shape = 'u32[72,128]{1,0:T(1,128)}', space=vmem, size = 0x9000, scoped, tag = 'internal scratch']
  %s0 = inlined_call_operand.vmem [shape: bf16[64,32], index: 0, kind: input, shape index: {}]
  %s1 = inlined_call_operand.vmem [shape: s32[64,4], index: 1, kind: input, shape index: {}]
  %s2 = inlined_call_operand.vmem [shape: bf16[32,256], index: 2, kind: input, shape index: {}]
  %s3 = inlined_call_operand.vmem [shape: f32[1,256], index: 3, kind: input, shape index: {}]
  %s4 = inlined_call_operand.hbm [shape: f32[64,128], index: 4, kind: output, shape index: {}]
  %s5 = sld [smem:[#allocation0]]
  $region49: #{tpu_custom_call.1} parent=0
    _
  %s7 = ssub.s32 1, %s5
  %s8 = scalar_select 0, %s7, %s5
  $region1: #{tpu_custom_call.1} parent=0
    #allocation2 [shape = 'u8[16384]{0}', space=vmem, size = 0x4000, scoped, tag = 'output window, operand 0']
    #allocation3 [shape = 's32[2]{0}', space=sflag, size = 0x8, scoped, tag = 'scoped memory for tpu_custom_call.1']
    %9 = vsyncpa [#allocation3], 0
    %s10 = scalar_lea.sflag [#allocation3], 1
    %11 = vsyncpa %s10, 0
    loop: start=0, step=1, limit=6
    $region2: #{tpu_custom_call.1} parent=1 // loop_pre_header
      _
    $region3: #{tpu_custom_call.1} parent=1 // loop_header
      %s13 = sphi 0, %s17
      %p14 = scmp.ge.s32.totalorder %s13, 6
      %s23 = sphi 0, %s25
      %s26 = sphi 0, %s23
      %s27 = sphi 0, %s26
      %s43 = sphi 0, %s27
      %s49 = sphi 0, %s51
      %s52 = sphi 0, %s49
      %s53 = sphi 0, %s52
      %s69 = sphi 0, %s53
      %s73 = sphi 0, %s73
      %s75 = sphi 0, %s73
      %s76 = sphi 0, %s75
      %s90 = sphi 0, %s76
      %s94 = sphi 0, %s94
      %s96 = sphi 0, %s94
      %s97 = sphi 0, %s96
      %s111 = sphi 0, %s97
      %s117 = sphi 0, %s119
      %s120 = sphi 0, %s117
      %s121 = sphi 0, %s120
      %s137 = sphi 0, %s121
    $region4: #{tpu_custom_call.1} parent=1 // loop_header_branch
      %16 = sbr.rel (%p14) target = $region8
    $region5: #{tpu_custom_call.1} parent=1 // loop_body
      %s18 = ssub.s32 %s13, 1
      %s19 = ssub.s32 %s13, 2
      %s20 = sadd.s32 %s13, 1
      %s21 = ssub.s32 %s13, %s20
      %p22 = scmp.eq.s32.totalorder %s21, 0
      %s24 = sadd.s32 %s23, 1
      %s25 = scalar_select %p22, %s23, %s24
      %p28 = pneg %p22
      %p29 = scmp.eq.s32.totalorder %s13, 3
      %p30 = por %p28, %p29
      %p31 = scmp.ne.s32.totalorder %s23, %s26
      %p32 = scmp.eq.s32.totalorder %s13, 0
      %p33 = por %p31, %p32
      %p34 = scmp.ne.s32.totalorder %s23, %s26
      %p35 = scmp.eq.s32.totalorder %s18, 3
      %p36 = por %p34, %p35
      %p37 = scmp.ne.s32.totalorder %s26, %s27
      %p38 = scmp.eq.s32.totalorder %s18, 0
      %p39 = por %p37, %p38
      %p40 = scmp.ne.s32.totalorder %s26, %s27
      %p41 = scmp.eq.s32.totalorder %s19, 3
      %p42 = por %p40, %p41
      %p44 = scmp.ne.s32.totalorder %s27, %s43
      %p45 = scmp.eq.s32.totalorder %s19, 0
      %p46 = por %p44, %p45
      %s47 = ssub.s32 %s13, %s20
      %p48 = scmp.eq.s32.totalorder %s47, 0
      %s50 = sadd.s32 %s49, 1
      %s51 = scalar_select %p48, %s49, %s50
      %p54 = pneg %p48
      %p55 = scmp.eq.s32.totalorder %s13, 3
      %p56 = por %p54, %p55
      %p57 = scmp.ne.s32.totalorder %s49, %s52
      %p58 = scmp.eq.s32.totalorder %s13, 0
      %p59 = por %p57, %p58
      %p60 = scmp.ne.s32.totalorder %s49, %s52
      %p61 = scmp.eq.s32.totalorder %s18, 3
      %p62 = por %p60, %p61
      %p63 = scmp.ne.s32.totalorder %s52, %s53
      %p64 = scmp.eq.s32.totalorder %s18, 0
      %p65 = por %p63, %p64
      %p66 = scmp.ne.s32.totalorder %s52, %s53
      %p67 = scmp.eq.s32.totalorder %s19, 3
      %p68 = por %p66, %p67
      %p70 = scmp.ne.s32.totalorder %s53, %s69
      %p71 = scmp.eq.s32.totalorder %s19, 0
      %p72 = por %p70, %p71
      %s74 = sadd.s32 %s73, 1
      %p77 = scmp.eq.s32.totalorder %s13, 3
      %p78 = scmp.ne.s32.totalorder %s73, %s75
      %p79 = scmp.eq.s32.totalorder %s13, 0
      %p80 = por %p78, %p79
      %p81 = scmp.ne.s32.totalorder %s73, %s75
      %p82 = scmp.eq.s32.totalorder %s18, 3
      %p83 = por %p81, %p82
      %p84 = scmp.ne.s32.totalorder %s75, %s76
      %p85 = scmp.eq.s32.totalorder %s18, 0
      %p86 = por %p84, %p85
      %p87 = scmp.ne.s32.totalorder %s75, %s76
      %p88 = scmp.eq.s32.totalorder %s19, 3
      %p89 = por %p87, %p88
      %p91 = scmp.ne.s32.totalorder %s76, %s90
      %p92 = scmp.eq.s32.totalorder %s19, 0
      %p93 = por %p91, %p92
      %s95 = sadd.s32 %s94, 1
      %p98 = scmp.eq.s32.totalorder %s13, 3
      %p99 = scmp.ne.s32.totalorder %s94, %s96
      %p100 = scmp.eq.s32.totalorder %s13, 0
      %p101 = por %p99, %p100
      %p102 = scmp.ne.s32.totalorder %s94, %s96
      %p103 = scmp.eq.s32.totalorder %s18, 3
      %p104 = por %p102, %p103
      %p105 = scmp.ne.s32.totalorder %s96, %s97
      %p106 = scmp.eq.s32.totalorder %s18, 0
      %p107 = por %p105, %p106
      %p108 = scmp.ne.s32.totalorder %s96, %s97
      %p109 = scmp.eq.s32.totalorder %s19, 3
      %p110 = por %p108, %p109
      %p112 = scmp.ne.s32.totalorder %s97, %s111
      %p113 = scmp.eq.s32.totalorder %s19, 0
      %p114 = por %p112, %p113
      %s115 = ssub.s32 %s13, %s20
      %p116 = scmp.eq.s32.totalorder %s115, 0
      %s118 = sadd.s32 %s117, 1
      %s119 = scalar_select %p116, %s117, %s118
      %p122 = pneg %p116
      %p123 = scmp.eq.s32.totalorder %s13, 3
      %p124 = por %p122, %p123
      %p125 = scmp.ne.s32.totalorder %s117, %s120
      %p126 = scmp.eq.s32.totalorder %s13, 0
      %p127 = por %p125, %p126
      %p128 = scmp.ne.s32.totalorder %s117, %s120
      %p129 = scmp.eq.s32.totalorder %s18, 3
      %p130 = por %p128, %p129
      %p131 = scmp.ne.s32.totalorder %s120, %s121
      %p132 = scmp.eq.s32.totalorder %s18, 0
      %p133 = por %p131, %p132
      %p134 = scmp.ne.s32.totalorder %s120, %s121
      %p135 = scmp.eq.s32.totalorder %s19, 3
      %p136 = por %p134, %p135
      %p138 = scmp.ne.s32.totalorder %s121, %s137
      %p139 = scmp.eq.s32.totalorder %s19, 0
      %p140 = por %p138, %p139
      %p141 = scmp.le.s32.totalorder 1, %s13
      %p142 = scmp.lt.s32.totalorder %s13, 5
      %p143 = pnand %p141, %p142
      %p144 = pneg %p143
      // Predicated region
      $region9: #{tpu_custom_call.1} parent=5 // pred_check
        _
      $region10: #{tpu_custom_call.1} parent=5 // pred_check_branch
        %146 = sbr.rel (%p143) target = $region12
      $region11: #{tpu_custom_call.1} parent=5 // pred_region
        %s147 = ssub.s32 %s13, 1
        // Predicated region
        $region13: #{tpu_custom_call.1} parent=11 // pred_check
          %p148 = pneg %p86
        $region14: #{tpu_custom_call.1} parent=11 // pred_check_branch
          %150 = sbr.rel (%p148) target = $region16
        $region15: #{tpu_custom_call.1} parent=11 // pred_region
          _
        $region16: #{tpu_custom_call.1} parent=11 // pred_fallthru
          _
        // Predicated region
        $region17: #{tpu_custom_call.1} parent=11 // pred_check
          %p151 = pneg %p107
        $region18: #{tpu_custom_call.1} parent=11 // pred_check_branch
          %153 = sbr.rel (%p151) target = $region20
        $region19: #{tpu_custom_call.1} parent=11 // pred_region
          _
        $region20: #{tpu_custom_call.1} parent=11 // pred_fallthru
          _
      $region12: #{tpu_custom_call.1} parent=5 // pred_fallthru
        _
      %p154 = scmp.lt.s32.totalorder %s13, 4
      // Predicated region
      $region21: #{tpu_custom_call.1} parent=5 // pred_check
        %p155 = pneg %p154
      $region22: #{tpu_custom_call.1} parent=5 // pred_check_branch
        %157 = sbr.rel (%p155) target = $region24
      $region23: #{tpu_custom_call.1} parent=5 // pred_region
        // Predicated region
        $region25: #{tpu_custom_call.1} parent=23 // pred_check
          %p158 = pneg %p33
        $region26: #{tpu_custom_call.1} parent=23 // pred_check_branch
          %160 = sbr.rel (%p158) target = $region28
        $region27: #{tpu_custom_call.1} parent=23 // pred_region
          %s161 = smul.u32 2, %s13
          %p162 = scmp.lt.s32.totalorder %s161, 7
          %s163 = scalar_select %p162, %s161, 7
          %s164 = smul.addr %s163, 4
          %s165 = scalar_lea.vmem %s0, %s164
          %s166 = smul.u32 2, %s13
        $region28: #{tpu_custom_call.1} parent=23 // pred_fallthru
          _
        // Predicated region
        $region29: #{tpu_custom_call.1} parent=23 // pred_check
          %p167 = pneg %p59
        $region30: #{tpu_custom_call.1} parent=23 // pred_check_branch
          %169 = sbr.rel (%p167) target = $region32
        $region31: #{tpu_custom_call.1} parent=23 // pred_region
          %s170 = smul.u32 2, %s13
          %p171 = scmp.lt.s32.totalorder %s170, 7
          %s172 = scalar_select %p171, %s170, 7
          %s173 = smul.addr %s172, 8
          %s174 = scalar_lea.vmem %s1, %s173
          %s175 = smul.u32 2, %s13
        $region32: #{tpu_custom_call.1} parent=23 // pred_fallthru
          _
      $region24: #{tpu_custom_call.1} parent=5 // pred_fallthru
        _
      %p176 = scmp.le.s32.totalorder 1, %s13
      %p177 = scmp.lt.s32.totalorder %s13, 5
      %p178 = pnand %p176, %p177
      %p179 = pneg %p178
      // Predicated region
      $region33: #{tpu_custom_call.1} parent=5 // pred_check
        _
      $region34: #{tpu_custom_call.1} parent=5 // pred_check_branch
        %181 = sbr.rel (%p178) target = $region36
      $region35: #{tpu_custom_call.1} parent=5 // pred_region
        %s182 = ssub.s32 %s13, 1
        %s183 = smul.u32 2, %s18
        %p184 = scmp.lt.s32.totalorder %s183, 7
        %s185 = scalar_select %p184, %s183, 7
        %s186 = smul.addr %s185, 4
        %s187 = scalar_lea.vmem %s0, %s186
        %p188 = pneg %p39
        %p189 = pneg %p36
        %s190 = smul.u32 2, %s18
        %p191 = scmp.lt.s32.totalorder %s190, 7
        %s192 = scalar_select %p191, %s190, 7
        %s193 = smul.addr %s192, 8
        %s194 = scalar_lea.vmem %s1, %s193
        %p195 = pneg %p65
        %p196 = pneg %p62
        %p197 = pneg %p86
        %p198 = pneg %p83
        %p199 = pneg %p107
        %p200 = pneg %p104
        %p201 = pneg %p133
        %p202 = pneg %p130
        %s203 = sand.u32 %s120, 1
        %s204 = scalar_lea.sflag [#allocation3], %s203
        %s205 = sand.u32 %s120, 1
        %s206 = smul.addr %s205, 16
        %s207 = scalar_lea.vmem [#allocation2], %s206
        %s208 = smul.u32 2, %s18
        %p209 = scmp.lt.s32.totalorder %s208, 7
        %s210 = scalar_select %p209, %s208, 7
        %s211 = smul.addr %s210, 4
        %s212 = scalar_lea.vmem %s0, %s211
        %s213 = smul.u32 2, %s18
        %s214 = smul.u32 2, %s18
        %p215 = scmp.lt.s32.totalorder %s214, 7
        %s216 = scalar_select %p215, %s214, 7
        %s217 = smul.addr %s216, 8
        %s218 = scalar_lea.vmem %s1, %s217
        %s219 = smul.u32 2, %s18
        %s220 = smul.u32 2, %s18
        %v222 = vld [vmem:[%s212] sm:$0xf]
        %v223 = vld [vmem:[%s212 + $0x4] sm:$0xf]
        %v224 = vld [vmem:[%s218] sm:$0xff]
        %v225 = vld [vmem:[%s218 + $0x8] sm:$0xff]
        %226 = vset.pattern.permute.xlu0 0
        %227 = vperm.xlu0 %226, %v224
        %v228 = vpop.permute.xlu0 %227
        %229 = vset.pattern.permute.xlu0 0
        %230 = vperm.xlu0 %229, %v225
        %v231 = vpop.permute.xlu0 %230
        %232 = vset.pattern.permute.xlu0 1
        %233 = vperm.xlu0 %232, %v224
        %v234 = vpop.permute.xlu0 %233
        %235 = vset.pattern.permute.xlu0 1
        %236 = vperm.xlu0 %235, %v225
        %v237 = vpop.permute.xlu0 %236
        %238 = vset.pattern.permute.xlu0 2
        %239 = vperm.xlu0 %238, %v224
        %v240 = vpop.permute.xlu0 %239
        %241 = vset.pattern.permute.xlu0 2
        %242 = vperm.xlu0 %241, %v225
        %v243 = vpop.permute.xlu0 %242
        %244 = vset.pattern.permute.xlu0 3
        %245 = vperm.xlu0 %244, %v224
        %v246 = vpop.permute.xlu0 %245
        %247 = vset.pattern.permute.xlu0 3
        %248 = vperm.xlu0 %247, %v225
        %v249 = vpop.permute.xlu0 %248
        %v250 = vld [vmem:[%s2] sm:$0xff]
        %v251 = vld [vmem:[%s2 + $0x8] sm:$0xff]
        %v252 = vld [vmem:[%s2 + $0x10] sm:$0xff]
        %v253 = vld [vmem:[%s2 + $0x18] sm:$0xff]
        %v254 = vld [vmem:[%s3] sm:$0x3]
        %v256 = vperm.slane %v254, 0
        %v257 = vperm.slane %v254, 1
        %v262 = vunpack.c.l.b16 %v222
        %v263 = vunpack.c.l.b16 %v223
        %v264 = vpack.c.b16 %v263, %v262
        %v269 = vunpack.c.l.b16 %v250
        %v270 = vunpack.c.h.b16 %v250
        %v271 = vunpack.c.l.b16 %v251
        %v272 = vunpack.c.h.b16 %v251
        %v273 = vunpack.c.l.b16 %v252
        %v274 = vunpack.c.h.b16 %v252
        %v275 = vunpack.c.l.b16 %v253
        %v276 = vunpack.c.h.b16 %v253
        %v277 = vpack.c.b16 %v271, %v269
        %v278 = vpack.c.b16 %v272, %v270
        %v279 = vpack.c.b16 %v275, %v273
        %v280 = vpack.c.b16 %v276, %v274
        %vm285 = vcmask 261120
        %v287 = vsel %vm285, %v264, 0
        %289 = vmatpush.bf16.msra.mxu0 0
        %290 = vmatpush.bf16.msra.mxu0 0
        %291 = vmatpush.bf16.msra.mxu0 0
        %292 = vmatpush.bf16.msra.mxu0 0
        %293 = vmatpush.bf16.msra.mxu0 0
        %294 = vmatpush.bf16.msra.mxu0 0
        %295 = vmatpush.bf16.msra.mxu0 %v279
        %296 = vmatpush.bf16.msra.mxu0 %v277
        %297 = vmatmul.bf16.gmra.mxu0 %v287
        %v298 = vpop.f32.mrf.mxu0
        %v299 = vadd.f32 %v256, %v298
        %v300 = vpop.f32.mrf.mxu0
        %v301 = vadd.f32 %v256, %v300
        %302 = vdwg.mxu0
        %303 = vmatpush.bf16.msra.mxu0 0
        %304 = vmatpush.bf16.msra.mxu0 0
        %305 = vmatpush.bf16.msra.mxu0 0
        %306 = vmatpush.bf16.msra.mxu0 0
        %307 = vmatpush.bf16.msra.mxu0 0
        %308 = vmatpush.bf16.msra.mxu0 0
        %309 = vmatpush.bf16.msra.mxu0 %v280
        %310 = vmatpush.bf16.msra.mxu0 %v278
        %311 = vmatmul.bf16.gmra.mxu0 %v287
        %v312 = vpop.f32.mrf.mxu0
        %v313 = vadd.f32 %v257, %v312
        %v314 = vpop.f32.mrf.mxu0
        %v315 = vadd.f32 %v257, %v314
        %316 = vdwg.mxu0
        %vm317 = vcmp.eq.s32.totalorder %v228, 0
        %vm318 = vcmp.eq.s32.totalorder %v231, 0
        %v319 = vsel %vm317, 1, 0
        %v320 = vsel %vm318, 1, 0
        %v321 = vcvt.s32.f32 %v319
        %v322 = vcvt.s32.f32 %v320
        %v323 = vmul.f32 %v321, %v299
        %v324 = vmul.f32 %v322, %v301
        %v325 = vadd.f32 %v323, 0.0
        %v326 = vadd.f32 %v324, 0.0
        %vm327 = vcmp.eq.s32.totalorder %v234, 0
        %vm328 = vcmp.eq.s32.totalorder %v237, 0
        %v329 = vsel %vm327, 1, 0
        %v330 = vsel %vm328, 1, 0
        %v331 = vcvt.s32.f32 %v329
        %v332 = vcvt.s32.f32 %v330
        %v333 = vmul.f32 %v331, %v299
        %v334 = vmul.f32 %v332, %v301
        %v335 = vadd.f32 %v333, 0.0
        %v336 = vadd.f32 %v334, 0.0
        %vm337 = vcmp.eq.s32.totalorder %v240, 0
        %vm338 = vcmp.eq.s32.totalorder %v243, 0
        %v339 = vsel %vm337, 1, 0
        %v340 = vsel %vm338, 1, 0
        %v341 = vcvt.s32.f32 %v339
        %v342 = vcvt.s32.f32 %v340
        %v343 = vmul.f32 %v341, %v299
        %v344 = vmul.f32 %v342, %v301
        %v345 = vadd.f32 %v343, 0.0
        %v346 = vadd.f32 %v344, 0.0
        %vm347 = vcmp.eq.s32.totalorder %v246, 0
        %vm348 = vcmp.eq.s32.totalorder %v249, 0
        %v349 = vsel %vm347, 1, 0
        %v350 = vsel %vm348, 1, 0
        %v351 = vcvt.s32.f32 %v349
        %v352 = vcvt.s32.f32 %v350
        %v353 = vmul.f32 %v351, %v299
        %v354 = vmul.f32 %v352, %v301
        %v355 = vadd.f32 %v353, 0.0
        %v356 = vadd.f32 %v354, 0.0
        %vm357 = vcmp.eq.s32.totalorder %v228, 1
        %vm358 = vcmp.eq.s32.totalorder %v231, 1
        %v359 = vsel %vm357, 1, 0
        %v360 = vsel %vm358, 1, 0
        %v361 = vcvt.s32.f32 %v359
        %v362 = vcvt.s32.f32 %v360
        %v363 = vmul.f32 %v361, %v299
        %v364 = vmul.f32 %v362, %v301
        %367 = vrot.lane.b32.xlu0 %v363, 96
        %v368 = vpop.permute.xlu0 %367
        %369 = vrot.lane.b32.xlu0 %v364, 96
        %v370 = vpop.permute.xlu0 %369
        %v373 = vadd.f32 %v325, %v368
        %v374 = vadd.f32 %v326, %v370
        %vm375 = vcmp.eq.s32.totalorder %v234, 1
        %vm376 = vcmp.eq.s32.totalorder %v237, 1
        %v377 = vsel %vm375, 1, 0
        %v378 = vsel %vm376, 1, 0
        %v379 = vcvt.s32.f32 %v377
        %v380 = vcvt.s32.f32 %v378
        %v381 = vmul.f32 %v379, %v299
        %v382 = vmul.f32 %v380, %v301
        %385 = vrot.lane.b32.xlu0 %v381, 96
        %v386 = vpop.permute.xlu0 %385
        %387 = vrot.lane.b32.xlu0 %v382, 96
        %v388 = vpop.permute.xlu0 %387
        %v391 = vadd.f32 %v335, %v386
        %v392 = vadd.f32 %v336, %v388
        %vm393 = vcmp.eq.s32.totalorder %v240, 1
        %vm394 = vcmp.eq.s32.totalorder %v243, 1
        %v395 = vsel %vm393, 1, 0
        %v396 = vsel %vm394, 1, 0
        %v397 = vcvt.s32.f32 %v395
        %v398 = vcvt.s32.f32 %v396
        %v399 = vmul.f32 %v397, %v299
        %v400 = vmul.f32 %v398, %v301
        %403 = vrot.lane.b32.xlu0 %v399, 96
        %v404 = vpop.permute.xlu0 %403
        %405 = vrot.lane.b32.xlu0 %v400, 96
        %v406 = vpop.permute.xlu0 %405
        %v409 = vadd.f32 %v345, %v404
        %v410 = vadd.f32 %v346, %v406
        %vm411 = vcmp.eq.s32.totalorder %v246, 1
        %vm412 = vcmp.eq.s32.totalorder %v249, 1
        %v413 = vsel %vm411, 1, 0
        %v414 = vsel %vm412, 1, 0
        %v415 = vcvt.s32.f32 %v413
        %v416 = vcvt.s32.f32 %v414
        %v417 = vmul.f32 %v415, %v299
        %v418 = vmul.f32 %v416, %v301
        %421 = vrot.lane.b32.xlu0 %v417, 96
        %v422 = vpop.permute.xlu0 %421
        %423 = vrot.lane.b32.xlu0 %v418, 96
        %v424 = vpop.permute.xlu0 %423
        %v427 = vadd.f32 %v355, %v422
        %v428 = vadd.f32 %v356, %v424
        %vm429 = vcmp.eq.s32.totalorder %v228, 2
        %vm430 = vcmp.eq.s32.totalorder %v231, 2
        %v431 = vsel %vm429, 1, 0
        %v432 = vsel %vm430, 1, 0
        %v433 = vcvt.s32.f32 %v431
        %v434 = vcvt.s32.f32 %v432
        %v435 = vmul.f32 %v433, %v299
        %v436 = vmul.f32 %v434, %v301
        %439 = vrot.lane.b32.xlu0 %v435, 64
        %v440 = vpop.permute.xlu0 %439
        %441 = vrot.lane.b32.xlu0 %v436, 64
        %v442 = vpop.permute.xlu0 %441
        %v445 = vadd.f32 %v373, %v440
        %v446 = vadd.f32 %v374, %v442
        %vm447 = vcmp.eq.s32.totalorder %v234, 2
        %vm448 = vcmp.eq.s32.totalorder %v237, 2
        %v449 = vsel %vm447, 1, 0
        %v450 = vsel %vm448, 1, 0
        %v451 = vcvt.s32.f32 %v449
        %v452 = vcvt.s32.f32 %v450
        %v453 = vmul.f32 %v451, %v299
        %v454 = vmul.f32 %v452, %v301
        %457 = vrot.lane.b32.xlu0 %v453, 64
        %v458 = vpop.permute.xlu0 %457
        %459 = vrot.lane.b32.xlu0 %v454, 64
        %v460 = vpop.permute.xlu0 %459
        %v463 = vadd.f32 %v391, %v458
        %v464 = vadd.f32 %v392, %v460
        %vm465 = vcmp.eq.s32.totalorder %v240, 2
        %vm466 = vcmp.eq.s32.totalorder %v243, 2
        %v467 = vsel %vm465, 1, 0
        %v468 = vsel %vm466, 1, 0
        %v469 = vcvt.s32.f32 %v467
        %v470 = vcvt.s32.f32 %v468
        %v471 = vmul.f32 %v469, %v299
        %v472 = vmul.f32 %v470, %v301
        %475 = vrot.lane.b32.xlu0 %v471, 64
        %v476 = vpop.permute.xlu0 %475
        %477 = vrot.lane.b32.xlu0 %v472, 64
        %v478 = vpop.permute.xlu0 %477
        %v481 = vadd.f32 %v409, %v476
        %v482 = vadd.f32 %v410, %v478
        %vm483 = vcmp.eq.s32.totalorder %v246, 2
        %vm484 = vcmp.eq.s32.totalorder %v249, 2
        %v485 = vsel %vm483, 1, 0
        %v486 = vsel %vm484, 1, 0
        %v487 = vcvt.s32.f32 %v485
        %v488 = vcvt.s32.f32 %v486
        %v489 = vmul.f32 %v487, %v299
        %v490 = vmul.f32 %v488, %v301
        %493 = vrot.lane.b32.xlu0 %v489, 64
        %v494 = vpop.permute.xlu0 %493
        %495 = vrot.lane.b32.xlu0 %v490, 64
        %v496 = vpop.permute.xlu0 %495
        %v499 = vadd.f32 %v427, %v494
        %v500 = vadd.f32 %v428, %v496
        %vm501 = vcmp.eq.s32.totalorder %v228, 3
        %vm502 = vcmp.eq.s32.totalorder %v231, 3
        %v503 = vsel %vm501, 1, 0
        %v504 = vsel %vm502, 1, 0
        %v505 = vcvt.s32.f32 %v503
        %v506 = vcvt.s32.f32 %v504
        %v507 = vmul.f32 %v505, %v299
        %v508 = vmul.f32 %v506, %v301
        %511 = vrot.lane.b32.xlu0 %v507, 32
        %v512 = vpop.permute.xlu0 %511
        %513 = vrot.lane.b32.xlu0 %v508, 32
        %v514 = vpop.permute.xlu0 %513
        %v517 = vadd.f32 %v445, %v512
        %v518 = vadd.f32 %v446, %v514
        %vm519 = vcmp.eq.s32.totalorder %v234, 3
        %vm520 = vcmp.eq.s32.totalorder %v237, 3
        %v521 = vsel %vm519, 1, 0
        %v522 = vsel %vm520, 1, 0
        %v523 = vcvt.s32.f32 %v521
        %v524 = vcvt.s32.f32 %v522
        %v525 = vmul.f32 %v523, %v299
        %v526 = vmul.f32 %v524, %v301
        %529 = vrot.lane.b32.xlu0 %v525, 32
        %v530 = vpop.permute.xlu0 %529
        %531 = vrot.lane.b32.xlu0 %v526, 32
        %v532 = vpop.permute.xlu0 %531
        %v535 = vadd.f32 %v463, %v530
        %v536 = vadd.f32 %v464, %v532
        %vm537 = vcmp.eq.s32.totalorder %v240, 3
        %vm538 = vcmp.eq.s32.totalorder %v243, 3
        %v539 = vsel %vm537, 1, 0
        %v540 = vsel %vm538, 1, 0
        %v541 = vcvt.s32.f32 %v539
        %v542 = vcvt.s32.f32 %v540
        %v543 = vmul.f32 %v541, %v299
        %v544 = vmul.f32 %v542, %v301
        %547 = vrot.lane.b32.xlu0 %v543, 32
        %v548 = vpop.permute.xlu0 %547
        %549 = vrot.lane.b32.xlu0 %v544, 32
        %v550 = vpop.permute.xlu0 %549
        %v553 = vadd.f32 %v481, %v548
        %v554 = vadd.f32 %v482, %v550
        %vm555 = vcmp.eq.s32.totalorder %v246, 3
        %vm556 = vcmp.eq.s32.totalorder %v249, 3
        %v557 = vsel %vm555, 1, 0
        %v558 = vsel %vm556, 1, 0
        %v559 = vcvt.s32.f32 %v557
        %v560 = vcvt.s32.f32 %v558
        %v561 = vmul.f32 %v559, %v299
        %v562 = vmul.f32 %v560, %v301
        %565 = vrot.lane.b32.xlu0 %v561, 32
        %v566 = vpop.permute.xlu0 %565
        %567 = vrot.lane.b32.xlu0 %v562, 32
        %v568 = vpop.permute.xlu0 %567
        %v571 = vadd.f32 %v499, %v566
        %v572 = vadd.f32 %v500, %v568
        %vm573 = vcmp.eq.s32.totalorder %v228, 4
        %vm574 = vcmp.eq.s32.totalorder %v231, 4
        %v575 = vsel %vm573, 1, 0
        %v576 = vsel %vm574, 1, 0
        %v577 = vcvt.s32.f32 %v575
        %v578 = vcvt.s32.f32 %v576
        %v579 = vmul.f32 %v577, %v313
        %v580 = vmul.f32 %v578, %v315
        %v581 = vadd.f32 %v517, %v579
        %v582 = vadd.f32 %v518, %v580
        %vm583 = vcmp.eq.s32.totalorder %v234, 4
        %vm584 = vcmp.eq.s32.totalorder %v237, 4
        %v585 = vsel %vm583, 1, 0
        %v586 = vsel %vm584, 1, 0
        %v587 = vcvt.s32.f32 %v585
        %v588 = vcvt.s32.f32 %v586
        %v589 = vmul.f32 %v587, %v313
        %v590 = vmul.f32 %v588, %v315
        %v591 = vadd.f32 %v535, %v589
        %v592 = vadd.f32 %v536, %v590
        %vm593 = vcmp.eq.s32.totalorder %v240, 4
        %vm594 = vcmp.eq.s32.totalorder %v243, 4
        %v595 = vsel %vm593, 1, 0
        %v596 = vsel %vm594, 1, 0
        %v597 = vcvt.s32.f32 %v595
        %v598 = vcvt.s32.f32 %v596
        %v599 = vmul.f32 %v597, %v313
        %v600 = vmul.f32 %v598, %v315
        %v601 = vadd.f32 %v553, %v599
        %v602 = vadd.f32 %v554, %v600
        %vm603 = vcmp.eq.s32.totalorder %v246, 4
        %vm604 = vcmp.eq.s32.totalorder %v249, 4
        %v605 = vsel %vm603, 1, 0
        %v606 = vsel %vm604, 1, 0
        %v607 = vcvt.s32.f32 %v605
        %v608 = vcvt.s32.f32 %v606
        %v609 = vmul.f32 %v607, %v313
        %v610 = vmul.f32 %v608, %v315
        %v611 = vadd.f32 %v571, %v609
        %v612 = vadd.f32 %v572, %v610
        %vm613 = vcmp.eq.s32.totalorder %v228, 5
        %vm614 = vcmp.eq.s32.totalorder %v231, 5
        %v615 = vsel %vm613, 1, 0
        %v616 = vsel %vm614, 1, 0
        %v617 = vcvt.s32.f32 %v615
        %v618 = vcvt.s32.f32 %v616
        %v619 = vmul.f32 %v617, %v313
        %v620 = vmul.f32 %v618, %v315
        %623 = vrot.lane.b32.xlu0 %v619, 96
        %v624 = vpop.permute.xlu0 %623
        %625 = vrot.lane.b32.xlu0 %v620, 96
        %v626 = vpop.permute.xlu0 %625
        %v629 = vadd.f32 %v581, %v624
        %v630 = vadd.f32 %v582, %v626
        %vm631 = vcmp.eq.s32.totalorder %v234, 5
        %vm632 = vcmp.eq.s32.totalorder %v237, 5
        %v633 = vsel %vm631, 1, 0
        %v634 = vsel %vm632, 1, 0
        %v635 = vcvt.s32.f32 %v633
        %v636 = vcvt.s32.f32 %v634
        %v637 = vmul.f32 %v635, %v313
        %v638 = vmul.f32 %v636, %v315
        %641 = vrot.lane.b32.xlu0 %v637, 96
        %v642 = vpop.permute.xlu0 %641
        %643 = vrot.lane.b32.xlu0 %v638, 96
        %v644 = vpop.permute.xlu0 %643
        %v647 = vadd.f32 %v591, %v642
        %v648 = vadd.f32 %v592, %v644
        %vm649 = vcmp.eq.s32.totalorder %v240, 5
        %vm650 = vcmp.eq.s32.totalorder %v243, 5
        %v651 = vsel %vm649, 1, 0
        %v652 = vsel %vm650, 1, 0
        %v653 = vcvt.s32.f32 %v651
        %v654 = vcvt.s32.f32 %v652
        %v655 = vmul.f32 %v653, %v313
        %v656 = vmul.f32 %v654, %v315
        %659 = vrot.lane.b32.xlu0 %v655, 96
        %v660 = vpop.permute.xlu0 %659
        %661 = vrot.lane.b32.xlu0 %v656, 96
        %v662 = vpop.permute.xlu0 %661
        %v665 = vadd.f32 %v601, %v660
        %v666 = vadd.f32 %v602, %v662
        %vm667 = vcmp.eq.s32.totalorder %v246, 5
        %vm668 = vcmp.eq.s32.totalorder %v249, 5
        %v669 = vsel %vm667, 1, 0
        %v670 = vsel %vm668, 1, 0
        %v671 = vcvt.s32.f32 %v669
        %v672 = vcvt.s32.f32 %v670
        %v673 = vmul.f32 %v671, %v313
        %v674 = vmul.f32 %v672, %v315
        %677 = vrot.lane.b32.xlu0 %v673, 96
        %v678 = vpop.permute.xlu0 %677
        %679 = vrot.lane.b32.xlu0 %v674, 96
        %v680 = vpop.permute.xlu0 %679
        %v683 = vadd.f32 %v611, %v678
        %v684 = vadd.f32 %v612, %v680
        %vm685 = vcmp.eq.s32.totalorder %v228, 6
        %vm686 = vcmp.eq.s32.totalorder %v231, 6
        %v687 = vsel %vm685, 1, 0
        %v688 = vsel %vm686, 1, 0
        %v689 = vcvt.s32.f32 %v687
        %v690 = vcvt.s32.f32 %v688
        %v691 = vmul.f32 %v689, %v313
        %v692 = vmul.f32 %v690, %v315
        %695 = vrot.lane.b32.xlu0 %v691, 64
        %v696 = vpop.permute.xlu0 %695
        %697 = vrot.lane.b32.xlu0 %v692, 64
        %v698 = vpop.permute.xlu0 %697
        %v701 = vadd.f32 %v629, %v696
        %v702 = vadd.f32 %v630, %v698
        %vm703 = vcmp.eq.s32.totalorder %v234, 6
        %vm704 = vcmp.eq.s32.totalorder %v237, 6
        %v705 = vsel %vm703, 1, 0
        %v706 = vsel %vm704, 1, 0
        %v707 = vcvt.s32.f32 %v705
        %v708 = vcvt.s32.f32 %v706
        %v709 = vmul.f32 %v707, %v313
        %v710 = vmul.f32 %v708, %v315
        %713 = vrot.lane.b32.xlu0 %v709, 64
        %v714 = vpop.permute.xlu0 %713
        %715 = vrot.lane.b32.xlu0 %v710, 64
        %v716 = vpop.permute.xlu0 %715
        %v719 = vadd.f32 %v647, %v714
        %v720 = vadd.f32 %v648, %v716
        %vm721 = vcmp.eq.s32.totalorder %v240, 6
        %vm722 = vcmp.eq.s32.totalorder %v243, 6
        %v723 = vsel %vm721, 1, 0
        %v724 = vsel %vm722, 1, 0
        %v725 = vcvt.s32.f32 %v723
        %v726 = vcvt.s32.f32 %v724
        %v727 = vmul.f32 %v725, %v313
        %v728 = vmul.f32 %v726, %v315
        %731 = vrot.lane.b32.xlu0 %v727, 64
        %v732 = vpop.permute.xlu0 %731
        %733 = vrot.lane.b32.xlu0 %v728, 64
        %v734 = vpop.permute.xlu0 %733
        %v737 = vadd.f32 %v665, %v732
        %v738 = vadd.f32 %v666, %v734
        %vm739 = vcmp.eq.s32.totalorder %v246, 6
        %vm740 = vcmp.eq.s32.totalorder %v249, 6
        %v741 = vsel %vm739, 1, 0
        %v742 = vsel %vm740, 1, 0
        %v743 = vcvt.s32.f32 %v741
        %v744 = vcvt.s32.f32 %v742
        %v745 = vmul.f32 %v743, %v313
        %v746 = vmul.f32 %v744, %v315
        %749 = vrot.lane.b32.xlu0 %v745, 64
        %v750 = vpop.permute.xlu0 %749
        %751 = vrot.lane.b32.xlu0 %v746, 64
        %v752 = vpop.permute.xlu0 %751
        %v755 = vadd.f32 %v683, %v750
        %v756 = vadd.f32 %v684, %v752
        %vm757 = vcmp.eq.s32.totalorder %v228, 7
        %vm758 = vcmp.eq.s32.totalorder %v231, 7
        %v759 = vsel %vm757, 1, 0
        %v760 = vsel %vm758, 1, 0
        %v761 = vcvt.s32.f32 %v759
        %v762 = vcvt.s32.f32 %v760
        %v763 = vmul.f32 %v761, %v313
        %v764 = vmul.f32 %v762, %v315
        %767 = vrot.lane.b32.xlu0 %v763, 32
        %v768 = vpop.permute.xlu0 %767
        %769 = vrot.lane.b32.xlu0 %v764, 32
        %v770 = vpop.permute.xlu0 %769
        %v773 = vadd.f32 %v701, %v768
        %v774 = vadd.f32 %v702, %v770
        %vm775 = vcmp.eq.s32.totalorder %v234, 7
        %vm776 = vcmp.eq.s32.totalorder %v237, 7
        %v777 = vsel %vm775, 1, 0
        %v778 = vsel %vm776, 1, 0
        %v779 = vcvt.s32.f32 %v777
        %v780 = vcvt.s32.f32 %v778
        %v781 = vmul.f32 %v779, %v313
        %v782 = vmul.f32 %v780, %v315
        %785 = vrot.lane.b32.xlu0 %v781, 32
        %v786 = vpop.permute.xlu0 %785
        %787 = vrot.lane.b32.xlu0 %v782, 32
        %v788 = vpop.permute.xlu0 %787
        %v791 = vadd.f32 %v719, %v786
        %v792 = vadd.f32 %v720, %v788
        %vm793 = vcmp.eq.s32.totalorder %v240, 7
        %vm794 = vcmp.eq.s32.totalorder %v243, 7
        %v795 = vsel %vm793, 1, 0
        %v796 = vsel %vm794, 1, 0
        %v797 = vcvt.s32.f32 %v795
        %v798 = vcvt.s32.f32 %v796
        %v799 = vmul.f32 %v797, %v313
        %v800 = vmul.f32 %v798, %v315
        %803 = vrot.lane.b32.xlu0 %v799, 32
        %v804 = vpop.permute.xlu0 %803
        %805 = vrot.lane.b32.xlu0 %v800, 32
        %v806 = vpop.permute.xlu0 %805
        %v809 = vadd.f32 %v737, %v804
        %v810 = vadd.f32 %v738, %v806
        %vm811 = vcmp.eq.s32.totalorder %v246, 7
        %vm812 = vcmp.eq.s32.totalorder %v249, 7
        %v813 = vsel %vm811, 1, 0
        %v814 = vsel %vm812, 1, 0
        %v815 = vcvt.s32.f32 %v813
        %v816 = vcvt.s32.f32 %v814
        %v817 = vmul.f32 %v815, %v313
        %v818 = vmul.f32 %v816, %v315
        %821 = vrot.lane.b32.xlu0 %v817, 32
        %v822 = vpop.permute.xlu0 %821
        %823 = vrot.lane.b32.xlu0 %v818, 32
        %v824 = vpop.permute.xlu0 %823
        %v827 = vadd.f32 %v755, %v822
        %v828 = vadd.f32 %v756, %v824
        %831 = vrot.lane.b32.xlu0 %v791, 32
        %v832 = vpop.permute.xlu0 %831
        %833 = vrot.lane.b32.xlu0 %v792, 32
        %v834 = vpop.permute.xlu0 %833
        %839 = vrot.lane.b32.xlu0 %v809, 64
        %v840 = vpop.permute.xlu0 %839
        %841 = vrot.lane.b32.xlu0 %v810, 64
        %v842 = vpop.permute.xlu0 %841
        %847 = vrot.lane.b32.xlu0 %v827, 96
        %v848 = vpop.permute.xlu0 %847
        %849 = vrot.lane.b32.xlu0 %v828, 96
        %v850 = vpop.permute.xlu0 %849
        %v853 = vsel %vm285, %v773, %v832
        %v854 = vsel %vm285, %v774, %v834
        %vm855 = vcmask 523264
        %v856 = vsel %vm855, %v853, %v840
        %v857 = vsel %vm855, %v854, %v842
        %vm858 = vcmask 785408
        %v859 = vsel %vm858, %v856, %v848
        %v860 = vsel %vm858, %v857, %v850
        %v861 = vmax.f32 %v859, 0.0
        %v862 = vmax.f32 %v860, 0.0
        %863 = vst [vmem:[%s207] sm:$0xff] %v861
        %864 = vst [vmem:[%s207 + $0x8] sm:$0xff] %v862
        %s865 = sand.u32 %s120, 1
        %s866 = scalar_lea.sflag [#allocation3], %s865
        %s867 = sand.u32 %s120, 1
        %s868 = smul.addr %s867, 16
        %s869 = scalar_lea.vmem [#allocation2], %s868
        // Predicated region
        $region37: #{tpu_custom_call.1} parent=35 // pred_check
          %p870 = pneg %p130
        $region38: #{tpu_custom_call.1} parent=35 // pred_check_branch
          %872 = sbr.rel (%p870) target = $region40
        $region39: #{tpu_custom_call.1} parent=35 // pred_region
          %s873 = smul.u32 2, %s18
          %875 = vsyncadd %s866, 0
          %s876 = smul.addr %s873, 8
          %s877 = scalar_lea.hbm %s4, %s876
          %s878 = sshll.u32 %s869, 4
          %s879 = int_to_ptr.vmem [resolvable:$true] %s878
          %s880 = sshll.u32 %s877, 4
          %s881 = int_to_ptr.hbm [resolvable:$true] %s880
          %886 = dma.vmem_to_hbm [thread:$0]  %s879, 256, %s881, %s866, 128, 128, 8
        $region40: #{tpu_custom_call.1} parent=35 // pred_fallthru
          _
      $region36: #{tpu_custom_call.1} parent=5 // pred_fallthru
        _
      %p887 = scmp.le.s32.totalorder 2, %s13
      // Predicated region
      $region41: #{tpu_custom_call.1} parent=5 // pred_check
        %p888 = pneg %p887
      $region42: #{tpu_custom_call.1} parent=5 // pred_check_branch
        %890 = sbr.rel (%p888) target = $region44
      $region43: #{tpu_custom_call.1} parent=5 // pred_region
        %s891 = ssub.s32 %s13, 2
        // Predicated region
        $region45: #{tpu_custom_call.1} parent=43 // pred_check
          %p892 = pneg %p136
        $region46: #{tpu_custom_call.1} parent=43 // pred_check_branch
          %894 = sbr.rel (%p892) target = $region48
        $region47: #{tpu_custom_call.1} parent=43 // pred_region
          %s895 = sand.u32 %s121, 1
          %s896 = scalar_lea.sflag [#allocation3], %s895
          %s897 = sand.u32 %s121, 1
          %s898 = smul.addr %s897, 16
          %s899 = scalar_lea.vmem [#allocation2], %s898
          %901 = dma.done %s896, 256
        $region48: #{tpu_custom_call.1} parent=43 // pred_fallthru
          _
      $region44: #{tpu_custom_call.1} parent=5 // pred_fallthru
        _
    $region6: #{tpu_custom_call.1} parent=1 // loop_footer
      %s17 = sadd.s32 1, %s13
    $region7: #{tpu_custom_call.1} parent=1 // loop_footer_branch
      %12 = sbr.rel target = $region3
    $region8: #{tpu_custom_call.1} parent=1 // loop_exit
      _
    %902 = vsyncpa [#allocation3], 1
    %s903 = scalar_lea.sflag [#allocation3], 1
    %904 = vsyncpa %s903, 1

</llo_original>
